<compile_context>
chip_gen: v7x
topology: tpu7x:2x2x1
jax: 0.10.0
libtpu: 0.0.40
codegen_flags: <defaults>
</compile_context>

<pallas_src>
import functools

import jax
import jax.numpy as jnp
from jax.experimental import pallas as pl
from jax.experimental.pallas import tpu as pltpu


def _round_up(x, m):
    return ((x + m - 1) // m) * m


def _metric_loss_kernel(anc_ref, pos_ref, neg_ref, anci_ref, posi_ref, negi_ref,
                        out_ref, *, margin, n_rows, block_n):
    """One batch tile.

    *_ref  : (BN, D) VMEM blocks of the six inputs (rows = batch, lanes = features).
    out_ref: (1, 8, 128) per-block partial loss sum (broadcast across the tile).
    """
    eps = jnp.float32(1e-6)          # torch.pairwise_distance default (added to diff)
    ro, tau, xi = 0.1, 1.0, 1.0
    softplus_threshold = 20000.0     # nn.Softplus(threshold=20000), beta=1

    def sumsq(a_ref, b_ref):
        d = a_ref[...].astype(jnp.float32) - b_ref[...].astype(jnp.float32) + eps
        return jnp.sum(d * d, axis=1, keepdims=True)          # (BN, 1)

    ss_AP = sumsq(anc_ref, pos_ref)
    d_AP = jnp.sqrt(ss_AP)
    d_AN = jnp.sqrt(sumsq(anc_ref, neg_ref))
    d_AI = jnp.sqrt(sumsq(anc_ref, anci_ref))
    d_PI = jnp.sqrt(sumsq(pos_ref, posi_ref))
    d_NI = jnp.sqrt(sumsq(neg_ref, negi_ref))

    # g1 = ro * d_AP  =>  g1^2 = ro^2 * sum-of-squares (skip sqrt->square round trip)
    g1_sq = (ro * ro) * ss_AP

    # nn.Softplus(beta=1, threshold=20000): x if x > threshold else log1p(exp(x))
    # (kept as-is to match torch semantics, including possible f32 overflow)
    sp_in = d_AP - d_AN + margin
    g2 = tau * jnp.where(sp_in > softplus_threshold, sp_in,
                         jnp.log1p(jnp.exp(sp_in)))

    g3 = (xi / 3.0) * (d_AI + d_PI + d_NI)

    loss = g1_sq + g2 * g2 + g3 * g3                           # (BN, 1)

    # Mask rows of a partial last block (and any garbage they may contain).
    row = (pl.program_id(0) * block_n
           + jax.lax.broadcasted_iota(jnp.int32, loss.shape, 0))
    loss = jnp.where(row < n_rows, loss, jnp.float32(0.0))

    partial = jnp.sum(loss)                                    # scalar partial sum
    out_ref[...] = jnp.broadcast_to(partial, out_ref.shape).astype(jnp.float32)


def metric_loss(anc, pos, neg, anc_ideal, pos_ideal, neg_ideal, *,
                margin, block_n=2048):
    """Mean MetricLoss over the batch. All inputs are (N, D)."""
    n, d = anc.shape

    # Pick a batch tile: multiple of 8 sublanes, capped so that the 6 inputs
    # x 2 pipeline buffers stay around ~24 MiB of VMEM even for large D.
    lanes_padded = _round_up(d, 128)
    bn_cap = max(8, ((2 * 1024 * 1024) // (lanes_padded * 4) // 8) * 8)
    bn = max(8, min(block_n, bn_cap, _round_up(n, 8)))
    bn = _round_up(bn, 8)
    grid = pl.cdiv(n, bn)

    kernel = functools.partial(_metric_loss_kernel,
                               margin=float(margin), n_rows=n, block_n=bn)

    in_spec = pl.BlockSpec((bn, d), lambda i: (i, 0))

    partials = pl.pallas_call(
        kernel,
        out_shape=jax.ShapeDtypeStruct((grid, 8, 128), jnp.float32),
        grid=(grid,),
        in_specs=[in_spec] * 6,
        out_specs=pl.BlockSpec((1, 8, 128), lambda i: (i, 0, 0)),
        compiler_params=pltpu.CompilerParams(
            dimension_semantics=("parallel",),   # independent blocks -> can shard TCs
            vmem_limit_bytes=64 * 1024 * 1024,
        ),
    )(anc, pos, neg, anc_ideal, pos_ideal, neg_ideal)

    # Tiny final reduction over per-block partial sums.
    return jnp.sum(partials[:, 0, 0]) / jnp.float32(n)


def _reference(anc, pos, neg, anci, posi, negi, margin):
    eps = 1e-6
    pd = lambda a, b: jnp.sqrt(jnp.sum((a - b + eps) ** 2, axis=-1))
    d_AN, d_AP = pd(anc, neg), pd(anc, pos)
    d_AI, d_PI, d_NI = pd(anc, anci), pd(pos, posi), pd(neg, negi)
    g1 = 0.1 * d_AP
    x = d_AP - d_AN + margin
    g2 = jnp.where(x > 20000.0, x, jnp.log1p(jnp.exp(x)))
    g3 = (d_AI + d_PI + d_NI) / 3.0
    return jnp.mean(g1 * g1 + g2 * g2 + g3 * g3)


if __name__ == "__main__":
    key = jax.random.PRNGKey(0)
    N, D = 8, 32          # batch of 8 embedding rows, 32-d features
    margin = 1.0          # MetricLoss(margin=1.0)

    ks = jax.random.split(key, 6)
    anc = jax.random.normal(ks[0], (N, D), jnp.float32)
    pos = jax.random.normal(ks[1], (N, D), jnp.float32)
    neg = jax.random.normal(ks[2], (N, D), jnp.float32)
    anc_ideal = jax.random.normal(ks[3], (N, D), jnp.float32)
    pos_ideal = jax.random.normal(ks[4], (N, D), jnp.float32)
    neg_ideal = jax.random.normal(ks[5], (N, D), jnp.float32)

    loss = metric_loss(anc, pos, neg, anc_ideal, pos_ideal, neg_ideal,
                       margin=margin)
    jax.block_until_ready(loss)

    ref = _reference(anc, pos, neg, anc_ideal, pos_ideal, neg_ideal, margin)
    assert jnp.allclose(loss, ref, rtol=1e-5, atol=1e-5), (loss, ref)

    # TODO(synk): nn.TripletMarginLoss is instantiated in the PyTorch forward but
    # never used, so it is intentionally not implemented.
    print("KERNEL_OK")
</pallas_src>

<mosaic_0001>
module attributes {stable_mosaic.version = 11 : i64} {
  func.func @_metric_loss_kernel(%arg0: i32, %arg1: memref<8x32xf32, #tpu.memory_space<vmem>>, %arg2: memref<8x32xf32, #tpu.memory_space<vmem>>, %arg3: memref<8x32xf32, #tpu.memory_space<vmem>>, %arg4: memref<8x32xf32, #tpu.memory_space<vmem>>, %arg5: memref<8x32xf32, #tpu.memory_space<vmem>>, %arg6: memref<8x32xf32, #tpu.memory_space<vmem>>, %arg7: memref<1x8x128xf32, #tpu.memory_space<vmem>>) attributes {dimension_semantics = [#tpu.dimension_semantics<parallel>], iteration_bounds = array<i64: 1>, scalar_prefetch = 0 : i64, scratch_operands = 0 : i64, tpu.core_type = #tpu.core_type<tc>, window_params = [{transform_indices = @transform_0, window_bounds = array<i64: 8, 32>}, {transform_indices = @transform_1, window_bounds = array<i64: 8, 32>}, {transform_indices = @transform_2, window_bounds = array<i64: 8, 32>}, {transform_indices = @transform_3, window_bounds = array<i64: 8, 32>}, {transform_indices = @transform_4, window_bounds = array<i64: 8, 32>}, {transform_indices = @transform_5, window_bounds = array<i64: 8, 32>}, {transform_indices = @transform_6, window_bounds = array<i64: 1, 8, 128>}]} {
    %c0 = arith.constant 0 : index
    %c0_0 = arith.constant 0 : index
    %0 = vector.load %arg1[%c0, %c0_0] : memref<8x32xf32, #tpu.memory_space<vmem>>, vector<8x32xf32>
    %c0_1 = arith.constant 0 : index
    %c0_2 = arith.constant 0 : index
    %1 = vector.load %arg2[%c0_1, %c0_2] : memref<8x32xf32, #tpu.memory_space<vmem>>, vector<8x32xf32>
    %2 = arith.subf %0, %1 : vector<8x32xf32>
    %cst = arith.constant 9.99999997E-7 : f32
    %3 = vector.broadcast %cst : f32 to vector<8x32xf32>
    %4 = arith.addf %2, %3 : vector<8x32xf32>
    %5 = arith.mulf %4, %4 : vector<8x32xf32>
    %cst_3 = arith.constant dense<0.000000e+00> : vector<8xf32>
    %6 = vector.multi_reduction <add>, %5, %cst_3 [1] : vector<8x32xf32> to vector<8xf32>
    %7 = vector.shape_cast %6 : vector<8xf32> to vector<8x1xf32>
    %8 = math.sqrt %7 : vector<8x1xf32>
    %c0_4 = arith.constant 0 : index
    %c0_5 = arith.constant 0 : index
    %9 = vector.load %arg1[%c0_4, %c0_5] : memref<8x32xf32, #tpu.memory_space<vmem>>, vector<8x32xf32>
    %c0_6 = arith.constant 0 : index
    %c0_7 = arith.constant 0 : index
    %10 = vector.load %arg3[%c0_6, %c0_7] : memref<8x32xf32, #tpu.memory_space<vmem>>, vector<8x32xf32>
    %11 = arith.subf %9, %10 : vector<8x32xf32>
    %cst_8 = arith.constant 9.99999997E-7 : f32
    %12 = vector.broadcast %cst_8 : f32 to vector<8x32xf32>
    %13 = arith.addf %11, %12 : vector<8x32xf32>
    %14 = arith.mulf %13, %13 : vector<8x32xf32>
    %cst_9 = arith.constant dense<0.000000e+00> : vector<8xf32>
    %15 = vector.multi_reduction <add>, %14, %cst_9 [1] : vector<8x32xf32> to vector<8xf32>
    %16 = vector.shape_cast %15 : vector<8xf32> to vector<8x1xf32>
    %17 = math.sqrt %16 : vector<8x1xf32>
    %c0_10 = arith.constant 0 : index
    %c0_11 = arith.constant 0 : index
    %18 = vector.load %arg1[%c0_10, %c0_11] : memref<8x32xf32, #tpu.memory_space<vmem>>, vector<8x32xf32>
    %c0_12 = arith.constant 0 : index
    %c0_13 = arith.constant 0 : index
    %19 = vector.load %arg4[%c0_12, %c0_13] : memref<8x32xf32, #tpu.memory_space<vmem>>, vector<8x32xf32>
    %20 = arith.subf %18, %19 : vector<8x32xf32>
    %cst_14 = arith.constant 9.99999997E-7 : f32
    %21 = vector.broadcast %cst_14 : f32 to vector<8x32xf32>
    %22 = arith.addf %20, %21 : vector<8x32xf32>
    %23 = arith.mulf %22, %22 : vector<8x32xf32>
    %cst_15 = arith.constant dense<0.000000e+00> : vector<8xf32>
    %24 = vector.multi_reduction <add>, %23, %cst_15 [1] : vector<8x32xf32> to vector<8xf32>
    %25 = vector.shape_cast %24 : vector<8xf32> to vector<8x1xf32>
    %26 = math.sqrt %25 : vector<8x1xf32>
    %c0_16 = arith.constant 0 : index
    %c0_17 = arith.constant 0 : index
    %27 = vector.load %arg2[%c0_16, %c0_17] : memref<8x32xf32, #tpu.memory_space<vmem>>, vector<8x32xf32>
    %c0_18 = arith.constant 0 : index
    %c0_19 = arith.constant 0 : index
    %28 = vector.load %arg5[%c0_18, %c0_19] : memref<8x32xf32, #tpu.memory_space<vmem>>, vector<8x32xf32>
    %29 = arith.subf %27, %28 : vector<8x32xf32>
    %cst_20 = arith.constant 9.99999997E-7 : f32
    %30 = vector.broadcast %cst_20 : f32 to vector<8x32xf32>
    %31 = arith.addf %29, %30 : vector<8x32xf32>
    %32 = arith.mulf %31, %31 : vector<8x32xf32>
    %cst_21 = arith.constant dense<0.000000e+00> : vector<8xf32>
    %33 = vector.multi_reduction <add>, %32, %cst_21 [1] : vector<8x32xf32> to vector<8xf32>
    %34 = vector.shape_cast %33 : vector<8xf32> to vector<8x1xf32>
    %35 = math.sqrt %34 : vector<8x1xf32>
    %c0_22 = arith.constant 0 : index
    %c0_23 = arith.constant 0 : index
    %36 = vector.load %arg3[%c0_22, %c0_23] : memref<8x32xf32, #tpu.memory_space<vmem>>, vector<8x32xf32>
    %c0_24 = arith.constant 0 : index
    %c0_25 = arith.constant 0 : index
    %37 = vector.load %arg6[%c0_24, %c0_25] : memref<8x32xf32, #tpu.memory_space<vmem>>, vector<8x32xf32>
    %38 = arith.subf %36, %37 : vector<8x32xf32>
    %cst_26 = arith.constant 9.99999997E-7 : f32
    %39 = vector.broadcast %cst_26 : f32 to vector<8x32xf32>
    %40 = arith.addf %38, %39 : vector<8x32xf32>
    %41 = arith.mulf %40, %40 : vector<8x32xf32>
    %cst_27 = arith.constant dense<0.000000e+00> : vector<8xf32>
    %42 = vector.multi_reduction <add>, %41, %cst_27 [1] : vector<8x32xf32> to vector<8xf32>
    %43 = vector.shape_cast %42 : vector<8xf32> to vector<8x1xf32>
    %44 = math.sqrt %43 : vector<8x1xf32>
    %cst_28 = arith.constant 0.00999999977 : f32
    %45 = vector.broadcast %cst_28 : f32 to vector<8x1xf32>
    %46 = arith.mulf %45, %7 : vector<8x1xf32>
    %47 = arith.subf %8, %17 : vector<8x1xf32>
    %cst_29 = arith.constant 1.000000e+00 : f32
    %48 = vector.broadcast %cst_29 : f32 to vector<8x1xf32>
    %49 = arith.addf %47, %48 : vector<8x1xf32>
    %cst_30 = arith.constant 2.000000e+04 : f32
    %50 = vector.broadcast %cst_30 : f32 to vector<8x1xf32>
    %51 = arith.cmpf ogt, %49, %50 : vector<8x1xf32>
    %52 = math.exp %49 : vector<8x1xf32>
    %53 = math.log1p %52 : vector<8x1xf32>
    %54 = arith.select %51, %49, %53 : vector<8x1xi1>, vector<8x1xf32>
    %cst_31 = arith.constant 1.000000e+00 : f32
    %55 = vector.broadcast %cst_31 : f32 to vector<8x1xf32>
    %56 = arith.mulf %55, %54 : vector<8x1xf32>
    %57 = arith.addf %26, %35 : vector<8x1xf32>
    %58 = arith.addf %57, %44 : vector<8x1xf32>
    %cst_32 = arith.constant 0.333333343 : f32
    %59 = vector.broadcast %cst_32 : f32 to vector<8x1xf32>
    %60 = arith.mulf %59, %58 : vector<8x1xf32>
    %61 = arith.mulf %56, %56 : vector<8x1xf32>
    %62 = arith.addf %46, %61 : vector<8x1xf32>
    %63 = arith.mulf %60, %60 : vector<8x1xf32>
    %64 = arith.addf %62, %63 : vector<8x1xf32>
    %c8_i32 = arith.constant 8 : i32
    %65 = arith.muli %arg0, %c8_i32 : i32
    %66 = tpu.iota {dimensions = array<i32: 0>} : vector<8x1xi32>
    %67 = vector.broadcast %65 : i32 to vector<8x1xi32>
    %68 = arith.addi %67, %66 : vector<8x1xi32>
    %c8_i32_33 = arith.constant 8 : i32
    %69 = vector.broadcast %c8_i32_33 : i32 to vector<8x1xi32>
    %70 = arith.cmpi slt, %68, %69 : vector<8x1xi32>
    %cst_34 = arith.constant 0.000000e+00 : f32
    %71 = vector.broadcast %cst_34 : f32 to vector<8x1xf32>
    %72 = arith.select %70, %64, %71 : vector<8x1xi1>, vector<8x1xf32>
    %73 = vector.shape_cast %72 : vector<8x1xf32> to vector<1x8x1xf32>
    %cst_35 = arith.constant dense<0.000000e+00> : vector<1xf32>
    %74 = vector.multi_reduction <add>, %73, %cst_35 [1, 2] : vector<1x8x1xf32> to vector<1xf32>
    %75 = vector.shape_cast %74 : vector<1xf32> to vector<1x1x1xf32>
    %76 = vector.extract %75[0, 0, 0] : f32 from vector<1x1x1xf32>
    %77 = vector.broadcast %76 : f32 to vector<1x8x128xf32>
    %c0_36 = arith.constant 0 : index
    %c0_37 = arith.constant 0 : index
    %c0_38 = arith.constant 0 : index
    %78 = vector.load %arg7[%c0_36, %c0_37, %c0_38] : memref<1x8x128xf32, #tpu.memory_space<vmem>>, vector<1x8x128xf32>
    tpu.vector_store %arg7[%c0_36, %c0_37, %c0_38], %77 {strides = array<i32>} : memref<1x8x128xf32, #tpu.memory_space<vmem>>, vector<1x8x128xf32>,
    return
  }
  func.func @transform_0(%arg0: i32) -> (i32, i32) {
    %c0_i32 = arith.constant 0 : i32
    %c0_i32_0 = arith.constant 0 : i32
    return %arg0, %c0_i32 : i32, i32
  }
  func.func @transform_1(%arg0: i32) -> (i32, i32) {
    %c0_i32 = arith.constant 0 : i32
    %c0_i32_0 = arith.constant 0 : i32
    return %arg0, %c0_i32 : i32, i32
  }
  func.func @transform_2(%arg0: i32) -> (i32, i32) {
    %c0_i32 = arith.constant 0 : i32
    %c0_i32_0 = arith.constant 0 : i32
    return %arg0, %c0_i32 : i32, i32
  }
  func.func @transform_3(%arg0: i32) -> (i32, i32) {
    %c0_i32 = arith.constant 0 : i32
    %c0_i32_0 = arith.constant 0 : i32
    return %arg0, %c0_i32 : i32, i32
  }
  func.func @transform_4(%arg0: i32) -> (i32, i32) {
    %c0_i32 = arith.constant 0 : i32
    %c0_i32_0 = arith.constant 0 : i32
    return %arg0, %c0_i32 : i32, i32
  }
  func.func @transform_5(%arg0: i32) -> (i32, i32) {
    %c0_i32 = arith.constant 0 : i32
    %c0_i32_0 = arith.constant 0 : i32
    return %arg0, %c0_i32 : i32, i32
  }
  func.func @transform_6(%arg0: i32) -> (i32, i32, i32) {
    %c0_i32 = arith.constant 0 : i32
    %c0_i32_0 = arith.constant 0 : i32
    %c0_i32_1 = arith.constant 0 : i32
    return %arg0, %c0_i32, %c0_i32_0 : i32, i32, i32
  }
}

</mosaic_0001>

<llo_original>
// kernel: tpu_custom_call.1
$region0: #{tpu_custom_call.1}
  #allocation0 [shape = 'u32[]', space=smem, size = 0x4, offset = 0x4, fixed_abs, tag = 'smem constant byte address 0x4 - core index']
  #allocation1 [shape = 'u32[144,128]{1,0:T(1,128)}', space=vmem, size = 0x12000, scoped, tag = 'internal scratch']
  %s0 = inlined_call_operand.hbm [shape: f32[8,32], index: 0, kind: input, shape index: {}]
  %s1 = inlined_call_operand.hbm [shape: f32[8,32], index: 1, kind: input, shape index: {}]
  %s2 = inlined_call_operand.hbm [shape: f32[8,32], index: 2, kind: input, shape index: {}]
  %s3 = inlined_call_operand.hbm [shape: f32[8,32], index: 3, kind: input, shape index: {}]
  %s4 = inlined_call_operand.hbm [shape: f32[8,32], index: 4, kind: input, shape index: {}]
  %s5 = inlined_call_operand.hbm [shape: f32[8,32], index: 5, kind: input, shape index: {}]
  %s6 = inlined_call_operand.hbm [shape: f32[1,8,128], index: 6, kind: output, shape index: {}]
  %s7 = sld [smem:[#allocation0]]
  $region58: #{tpu_custom_call.1} parent=0
    _
  %s9 = ssub.s32 1, %s7
  %s10 = scalar_select 0, %s9, %s7
  $region1: #{tpu_custom_call.1} parent=0
    #allocation2 [shape = 'u8[4096]{0}', space=vmem, size = 0x1000, scoped, tag = 'input window, operand 0, single buffered']
    #allocation3 [shape = 's32[1]{0}', space=sflag, size = 0x4, scoped, tag = 'scoped memory for tpu_custom_call.1']
    #allocation4 [shape = 's32[1]{0}', space=sflag, size = 0x4, scoped, tag = 'scoped memory for tpu_custom_call.1']
    #allocation5 [shape = 'u8[4096]{0}', space=vmem, size = 0x1000, scoped, tag = 'input window, operand 1, single buffered']
    #allocation6 [shape = 's32[1]{0}', space=sflag, size = 0x4, scoped, tag = 'scoped memory for tpu_custom_call.1']
    #allocation7 [shape = 'u8[4096]{0}', space=vmem, size = 0x1000, scoped, tag = 'input window, operand 2, single buffered']
    #allocation8 [shape = 'u8[4096]{0}', space=vmem, size = 0x1000, scoped, tag = 'input window, operand 3, single buffered']
    #allocation9 [shape = 's32[1]{0}', space=sflag, size = 0x4, scoped, tag = 'scoped memory for tpu_custom_call.1']
    #allocation10 [shape = 'u8[4096]{0}', space=vmem, size = 0x1000, scoped, tag = 'input window, operand 4, single buffered']
    #allocation11 [shape = 'u8[4096]{0}', space=vmem, size = 0x1000, scoped, tag = 'input window, operand 5, single buffered']
    #allocation12 [shape = 's32[1]{0}', space=sflag, size = 0x4, scoped, tag = 'scoped memory for tpu_custom_call.1']
    #allocation13 [shape = 'u8[4096]{0}', space=vmem, size = 0x1000, scoped, tag = 'output window, operand 0, single buffered']
    %11 = vsyncpa [#allocation3], 0
    %12 = vsyncpa [#allocation6], 0
    %13 = vsyncpa [#allocation9], 0
    %14 = vsyncpa [#allocation12], 0
    %15 = vsyncpa [#allocation4], 0
    // Predicated region
    $region2: #{tpu_custom_call.1} parent=1 // pred_check
      _
    $region3: #{tpu_custom_call.1} parent=1 // pred_check_branch
      %17 = sbr.rel (0) target = $region5
    $region4: #{tpu_custom_call.1} parent=1 // pred_region
      %s19 = ssub.s32 128, 128
      %20 = vsyncadd [#allocation3], %s19
      %s22 = sshll.u32 [#allocation2], 4
      %s23 = int_to_ptr.vmem [resolvable:$true] %s22
      %25 = dma.hbm_to_vmem [thread:$0]  %s0, 128, %s23, [#allocation3]
    $region5: #{tpu_custom_call.1} parent=1 // pred_fallthru
      _
    // Predicated region
    $region6: #{tpu_custom_call.1} parent=1 // pred_check
      _
    $region7: #{tpu_custom_call.1} parent=1 // pred_check_branch
      %27 = sbr.rel (0) target = $region9
    $region8: #{tpu_custom_call.1} parent=1 // pred_region
      %s29 = ssub.s32 128, 128
      %30 = vsyncadd [#allocation6], %s29
      %s32 = sshll.u32 [#allocation5], 4
      %s33 = int_to_ptr.vmem [resolvable:$true] %s32
      %35 = dma.hbm_to_vmem [thread:$0]  %s1, 128, %s33, [#allocation6]
    $region9: #{tpu_custom_call.1} parent=1 // pred_fallthru
      _
    // Predicated region
    $region10: #{tpu_custom_call.1} parent=1 // pred_check
      _
    $region11: #{tpu_custom_call.1} parent=1 // pred_check_branch
      %37 = sbr.rel (0) target = $region13
    $region12: #{tpu_custom_call.1} parent=1 // pred_region
      %s39 = ssub.s32 128, 128
      %40 = vsyncadd [#allocation6], %s39
      %s42 = sshll.u32 [#allocation7], 4
      %s43 = int_to_ptr.vmem [resolvable:$true] %s42
      %45 = dma.hbm_to_vmem [thread:$0]  %s2, 128, %s43, [#allocation6]
    $region13: #{tpu_custom_call.1} parent=1 // pred_fallthru
      _
    // Predicated region
    $region14: #{tpu_custom_call.1} parent=1 // pred_check
      _
    $region15: #{tpu_custom_call.1} parent=1 // pred_check_branch
      %47 = sbr.rel (0) target = $region17
    $region16: #{tpu_custom_call.1} parent=1 // pred_region
      %s49 = ssub.s32 128, 128
      %50 = vsyncadd [#allocation9], %s49
      %s52 = sshll.u32 [#allocation8], 4
      %s53 = int_to_ptr.vmem [resolvable:$true] %s52
      %55 = dma.hbm_to_vmem [thread:$0]  %s3, 128, %s53, [#allocation9]
    $region17: #{tpu_custom_call.1} parent=1 // pred_fallthru
      _
    // Predicated region
    $region18: #{tpu_custom_call.1} parent=1 // pred_check
      _
    $region19: #{tpu_custom_call.1} parent=1 // pred_check_branch
      %57 = sbr.rel (0) target = $region21
    $region20: #{tpu_custom_call.1} parent=1 // pred_region
      %s59 = ssub.s32 128, 128
      %60 = vsyncadd [#allocation9], %s59
      %s62 = sshll.u32 [#allocation10], 4
      %s63 = int_to_ptr.vmem [resolvable:$true] %s62
      %65 = dma.hbm_to_vmem [thread:$0]  %s4, 128, %s63, [#allocation9]
    $region21: #{tpu_custom_call.1} parent=1 // pred_fallthru
      _
    // Predicated region
    $region22: #{tpu_custom_call.1} parent=1 // pred_check
      _
    $region23: #{tpu_custom_call.1} parent=1 // pred_check_branch
      %67 = sbr.rel (0) target = $region25
    $region24: #{tpu_custom_call.1} parent=1 // pred_region
      %s69 = ssub.s32 128, 128
      %70 = vsyncadd [#allocation12], %s69
      %s72 = sshll.u32 [#allocation11], 4
      %s73 = int_to_ptr.vmem [resolvable:$true] %s72
      %75 = dma.hbm_to_vmem [thread:$0]  %s5, 128, %s73, [#allocation12]
    $region25: #{tpu_custom_call.1} parent=1 // pred_fallthru
      _
    // Predicated region
    $region26: #{tpu_custom_call.1} parent=1 // pred_check
      _
    $region27: #{tpu_custom_call.1} parent=1 // pred_check_branch
      %77 = sbr.rel (0) target = $region29
    $region28: #{tpu_custom_call.1} parent=1 // pred_region
      %78 = dma.done [#allocation3], 128
    $region29: #{tpu_custom_call.1} parent=1 // pred_fallthru
      _
    // Predicated region
    $region30: #{tpu_custom_call.1} parent=1 // pred_check
      _
    $region31: #{tpu_custom_call.1} parent=1 // pred_check_branch
      %80 = sbr.rel (0) target = $region33
    $region32: #{tpu_custom_call.1} parent=1 // pred_region
      %81 = dma.done [#allocation6], 128
    $region33: #{tpu_custom_call.1} parent=1 // pred_fallthru
      _
    // Predicated region
    $region34: #{tpu_custom_call.1} parent=1 // pred_check
      _
    $region35: #{tpu_custom_call.1} parent=1 // pred_check_branch
      %83 = sbr.rel (0) target = $region37
    $region36: #{tpu_custom_call.1} parent=1 // pred_region
      %84 = dma.done [#allocation6], 128
    $region37: #{tpu_custom_call.1} parent=1 // pred_fallthru
      _
    // Predicated region
    $region38: #{tpu_custom_call.1} parent=1 // pred_check
      _
    $region39: #{tpu_custom_call.1} parent=1 // pred_check_branch
      %86 = sbr.rel (0) target = $region41
    $region40: #{tpu_custom_call.1} parent=1 // pred_region
      %87 = dma.done [#allocation9], 128
    $region41: #{tpu_custom_call.1} parent=1 // pred_fallthru
      _
    // Predicated region
    $region42: #{tpu_custom_call.1} parent=1 // pred_check
      _
    $region43: #{tpu_custom_call.1} parent=1 // pred_check_branch
      %89 = sbr.rel (0) target = $region45
    $region44: #{tpu_custom_call.1} parent=1 // pred_region
      %90 = dma.done [#allocation9], 128
    $region45: #{tpu_custom_call.1} parent=1 // pred_fallthru
      _
    // Predicated region
    $region46: #{tpu_custom_call.1} parent=1 // pred_check
      _
    $region47: #{tpu_custom_call.1} parent=1 // pred_check_branch
      %92 = sbr.rel (0) target = $region49
    $region48: #{tpu_custom_call.1} parent=1 // pred_region
      %93 = dma.done [#allocation12], 128
    $region49: #{tpu_custom_call.1} parent=1 // pred_fallthru
      _
    %v94 = vld [vmem:[#allocation2] sm:$0xff]
    %v95 = vld [vmem:[#allocation5] sm:$0xff]
    %v96 = vsub.f32 %v94, %v95
    %v97 = vadd.f32 %v96, 1e-06
    %v98 = vmul.f32 %v97, %v97
    %vm99 = vcmask 261120
    %v100 = vsel %vm99, %v98, 0.0
    %101 = vadd.xlane.f32.xlu0 %v100
    %v102 = vpop.xlane.xlu0 %101
    %v103 = vrsqrt.pop %v102
    %v104 = vmul.f32 %v102, %v103
    %vm105 = vcmp.eq.f32.partialorder %v102, inf
    %v106 = vsel %vm105, %v102, %v104
    %vm107 = vcmp.eq.f32.partialorder %v102, 0.0
    %v108 = vand.u32 %v102, 2147483648
    %v109 = vsel %vm107, %v108, %v106
    %v110 = vld [vmem:[#allocation7] sm:$0xff]
    %v111 = vsub.f32 %v94, %v110
    %v112 = vadd.f32 %v111, 1e-06
    %v113 = vmul.f32 %v112, %v112
    %v114 = vsel %vm99, %v113, 0.0
    %115 = vadd.xlane.f32.xlu0 %v114
    %v116 = vpop.xlane.xlu0 %115
    %v117 = vrsqrt.pop %v116
    %v118 = vmul.f32 %v116, %v117
    %vm119 = vcmp.eq.f32.partialorder %v116, inf
    %v120 = vsel %vm119, %v116, %v118
    %vm121 = vcmp.eq.f32.partialorder %v116, 0.0
    %v122 = vand.u32 %v116, 2147483648
    %v123 = vsel %vm121, %v122, %v120
    %v124 = vld [vmem:[#allocation8] sm:$0xff]
    %v125 = vsub.f32 %v94, %v124
    %v126 = vadd.f32 %v125, 1e-06
    %v127 = vmul.f32 %v126, %v126
    %v128 = vsel %vm99, %v127, 0.0
    %129 = vadd.xlane.f32.xlu0 %v128
    %v130 = vpop.xlane.xlu0 %129
    %v131 = vrsqrt.pop %v130
    %v132 = vmul.f32 %v130, %v131
    %vm133 = vcmp.eq.f32.partialorder %v130, inf
    %v134 = vsel %vm133, %v130, %v132
    %vm135 = vcmp.eq.f32.partialorder %v130, 0.0
    %v136 = vand.u32 %v130, 2147483648
    %v137 = vsel %vm135, %v136, %v134
    %v138 = vld [vmem:[#allocation10] sm:$0xff]
    %v139 = vsub.f32 %v95, %v138
    %v140 = vadd.f32 %v139, 1e-06
    %v141 = vmul.f32 %v140, %v140
    %v142 = vsel %vm99, %v141, 0.0
    %143 = vadd.xlane.f32.xlu0 %v142
    %v144 = vpop.xlane.xlu0 %143
    %v145 = vrsqrt.pop %v144
    %v146 = vmul.f32 %v144, %v145
    %vm147 = vcmp.eq.f32.partialorder %v144, inf
    %v148 = vsel %vm147, %v144, %v146
    %vm149 = vcmp.eq.f32.partialorder %v144, 0.0
    %v150 = vand.u32 %v144, 2147483648
    %v151 = vsel %vm149, %v150, %v148
    %v152 = vld [vmem:[#allocation11] sm:$0xff]
    %v153 = vsub.f32 %v110, %v152
    %v154 = vadd.f32 %v153, 1e-06
    %v155 = vmul.f32 %v154, %v154
    %v156 = vsel %vm99, %v155, 0.0
    %157 = vadd.xlane.f32.xlu0 %v156
    %v158 = vpop.xlane.xlu0 %157
    %v159 = vrsqrt.pop %v158
    %v160 = vmul.f32 %v158, %v159
    %vm161 = vcmp.eq.f32.partialorder %v158, inf
    %v162 = vsel %vm161, %v158, %v160
    %vm163 = vcmp.eq.f32.partialorder %v158, 0.0
    %v164 = vand.u32 %v158, 2147483648
    %v165 = vsel %vm163, %v164, %v162
    %v166 = vmul.f32 %v102, 0.01
    %v167 = vsub.f32 %v109, %v123
    %v168 = vadd.f32 %v167, 1.0
    %vm169 = vcmp.gt.f32.partialorder %v168, 20000.0
    %v170 = vmul.f32 %v168, 1.442695
    %v171 = vpow.pop %v170
    %v172 = vadd.f32 %v171, 1.0
    %v173 = vlog2.pop %v172
    %v174 = vmul.f32 %v173, 0.6931472
    %v175 = vmul.f32 -0.5, %v171
    %v176 = vadd.f32 %v175, 1.0
    %v177 = vmul.f32 %v176, %v171
    %v178 = vand.u32 2147483647, %v171
    %vm179 = vcmp.lt.f32.partialorder %v178, 0.0004427343
    %v180 = vsel %vm179, %v177, %v174
    %v181 = vsel %vm169, %v168, %v180
    %v182 = vadd.f32 %v137, %v151
    %v183 = vadd.f32 %v182, %v165
    %v184 = vmul.f32 %v183, 0.33333334
    %v185 = vmul.f32 %v181, %v181
    %v186 = vadd.f32 %v166, %v185
    %v187 = vmul.f32 %v184, %v184
    %v188 = vadd.f32 %v186, %v187
    %s189 = smul.u32 0, 8
    %v190 = vlaneseq
    %v191 = vshrl.u32 %v190, 7
    %v192 = vstv %s189
    %v193 = vadd.s32 %v192, %v191
    %vm194 = vcmp.lt.s32.totalorder %v193, 8
    %v195 = vsel %vm194, %v188, 0.0
    %vm196 = vcmask 7168
    %v197 = vsel %vm196, %v195, 0.0
    %198 = vadd.xlane.f32.xlu0 %v197
    %v199 = vpop.xlane.xlu0 %198
    %v200 = vrot.slane %v199, 4
    %v201 = vadd.f32 %v199, %v200
    %v202 = vrot.slane %v201, 2
    %v203 = vadd.f32 %v201, %v202
    %v204 = vrot.slane %v203, 1
    %v205 = vadd.f32 %v203, %v204
    %s206 = vtos %v205
    %v207 = vstv %s206
    %208 = vst [vmem:[#allocation13] sm:$0xff] %v207
    // Predicated region
    $region50: #{tpu_custom_call.1} parent=1 // pred_check
      _
    $region51: #{tpu_custom_call.1} parent=1 // pred_check_branch
      %210 = sbr.rel (0) target = $region53
    $region52: #{tpu_custom_call.1} parent=1 // pred_region
      %s212 = ssub.s32 128, 128
      %213 = vsyncadd [#allocation4], %s212
      %s215 = sshll.u32 [#allocation13], 4
      %s216 = int_to_ptr.vmem [resolvable:$true] %s215
      %218 = dma.vmem_to_hbm [thread:$0]  %s216, 128, %s6, [#allocation4]
    $region53: #{tpu_custom_call.1} parent=1 // pred_fallthru
      _
    // Predicated region
    $region54: #{tpu_custom_call.1} parent=1 // pred_check
      _
    $region55: #{tpu_custom_call.1} parent=1 // pred_check_branch
      %220 = sbr.rel (0) target = $region57
    $region56: #{tpu_custom_call.1} parent=1 // pred_region
      %221 = dma.done [#allocation4], 128
    $region57: #{tpu_custom_call.1} parent=1 // pred_fallthru
      _
    %222 = vsyncpa [#allocation3], 1
    %223 = vsyncpa [#allocation6], 1
    %224 = vsyncpa [#allocation9], 1
    %225 = vsyncpa [#allocation12], 1
    %226 = vsyncpa [#allocation4], 1

</llo_original>
